<compile_context>
chip_gen: v7x
topology: tpu7x:2x2x1
jax: 0.10.0
libtpu: 0.0.40
codegen_flags: <defaults>
</compile_context>

<pallas_src>
import functools

import jax
import jax.numpy as jnp
from jax.experimental import pallas as pl
from jax.experimental.pallas import tpu as pltpu


# ------------------------------------------------------------- chip tuning --

def _vmem_limit_bytes():
    """Generation-aware scoped-VMEM cap: ~3/4 of physical, max 100 MiB.

    v5e/v6e (128 MiB) -> 96 MiB; v7x (64 MiB/TC) -> 48 MiB; falls back to a
    conservative 48 MiB if the hardware query is unavailable.
    """
    default = 48 * 1024 * 1024
    try:
        cap = int(getattr(pltpu.get_tpu_info(), "vmem_capacity_bytes", 0))
    except Exception:
        cap = 0
    if cap <= 0:
        return default
    return max(default, min(cap * 3 // 4, 100 * 1024 * 1024))


VMEM_LIMIT = _vmem_limit_bytes()
# Per-kernel tile budget: headroom for Mosaic internal scratch + pipelining.
TILE_BUDGET = int(VMEM_LIMIT * 0.6)


def _divisor_tiles(dim, candidates):
    """All candidates that divide `dim` (largest first), else the full dim."""
    cands = [c for c in candidates if c <= dim and dim % c == 0]
    return cands if cands else [dim]


def _dense_tiles(M, N, K, out_bytes, fuse_ln):
    """Largest (tm, tn, tk) whose double-buffered footprint fits the budget."""
    tms = _divisor_tiles(M, (512, 256, 128, 64, 32, 16, 8))
    tns = [N] if fuse_ln else _divisor_tiles(N, (2048, 1024, 512, 256, 128))
    tks = _divisor_tiles(K, (768, 512, 384, 256, 128))
    for tm in tms:
        for tn in tns:
            for tk in tks:
                footprint = (2 * tm * tk * 2          # x tile (bf16) x2 bufs
                             + 2 * tk * tn * 2        # w tile (bf16) x2 bufs
                             + 2 * tm * tn * out_bytes
                             + tm * tn * 4            # fp32 accumulator
                             + 6 * tn * 4)            # bias / gamma / beta rows
                if fuse_ln:
                    footprint += 2 * tm * N * 2       # residual tile (bf16)
                if footprint <= TILE_BUDGET:
                    return tm, tn, tk
    return tms[-1], tns[-1], tks[-1]


def _head_group_size(num_heads, head_dim):
    """Largest divisor of num_heads whose lane span (hpg * D) fits 128 lanes."""
    target = max(1, 128 // head_dim)
    hpg = 1
    for c in range(1, num_heads + 1):
        if num_heads % c == 0 and c <= target:
            hpg = c
    return hpg


# ------------------------------------------------------------------ kernels --

def _dense_kernel(*refs, activation, fuse_ln):
    """Tiled y = act(x @ W + b), optionally fused residual-add + LayerNorm."""
    if fuse_ln:
        x_ref, w_ref, b_ref, res_ref, g_ref, beta_ref, o_ref, acc_ref = refs
    else:
        x_ref, w_ref, b_ref, o_ref, acc_ref = refs
    k = pl.program_id(2)

    @pl.when(k == 0)
    def _():
        acc_ref[...] = jnp.zeros_like(acc_ref)

    acc_ref[...] += jnp.dot(
        x_ref[...].astype(jnp.bfloat16),
        w_ref[...].astype(jnp.bfloat16),
        preferred_element_type=jnp.float32,
    )

    @pl.when(k == pl.num_programs(2) - 1)
    def _():
        y = acc_ref[...] + b_ref[...]
        if activation == "gelu":
            y = jax.nn.gelu(y)
        elif activation == "tanh":
            y = jnp.tanh(y)
        if fuse_ln:
            # residual add + BERT LayerNorm (eps=1e-12) fused into the epilogue
            y = y + res_ref[...].astype(jnp.float32)
            mu = jnp.mean(y, axis=-1, keepdims=True)
            var = jnp.mean((y - mu) ** 2, axis=-1, keepdims=True)
            y = (y - mu) * jax.lax.rsqrt(var + 1e-12)
            y = y * g_ref[...] + beta_ref[...]
        o_ref[...] = y.astype(o_ref.dtype)


def dense(x, w, b, activation="none", out_dtype=jnp.bfloat16,
          residual=None, ln_gamma=None, ln_beta=None):
    """x:[M,K] @ w:[K,N] + b; bf16 MXU inputs, fp32 accumulation.

    If ln_gamma/ln_beta are given, residual-add + LayerNorm are fused into the
    final-K epilogue (the N axis is then kept as one full tile so the LN sees
    the whole hidden row).
    """
    M, K = x.shape
    N = w.shape[1]
    fuse_ln = ln_gamma is not None
    out_bytes = jnp.dtype(out_dtype).itemsize
    tm, tn, tk = _dense_tiles(M, N, K, out_bytes, fuse_ln)

    operands = [x, w, b.reshape(1, N)]
    in_specs = [
        pl.BlockSpec((tm, tk), lambda i, j, k: (i, k)),
        pl.BlockSpec((tk, tn), lambda i, j, k: (k, j)),
        pl.BlockSpec((1, tn), lambda i, j, k: (0, j)),
    ]
    if fuse_ln:
        assert tn == N, "fused LayerNorm needs the full hidden row per tile"
        operands += [residual, ln_gamma.reshape(1, N), ln_beta.reshape(1, N)]
        in_specs += [
            pl.BlockSpec((tm, N), lambda i, j, k: (i, 0)),
            pl.BlockSpec((1, N), lambda i, j, k: (0, 0)),
            pl.BlockSpec((1, N), lambda i, j, k: (0, 0)),
        ]
    return pl.pallas_call(
        functools.partial(_dense_kernel, activation=activation, fuse_ln=fuse_ln),
        grid=(M // tm, N // tn, K // tk),
        in_specs=in_specs,
        out_specs=pl.BlockSpec((tm, tn), lambda i, j, k: (i, j)),
        out_shape=jax.ShapeDtypeStruct((M, N), out_dtype),
        scratch_shapes=[pltpu.VMEM((tm, tn), jnp.float32)],
        compiler_params=pltpu.CompilerParams(
            dimension_semantics=("parallel", "parallel", "arbitrary"),
            vmem_limit_bytes=VMEM_LIMIT,
        ),
    )(*operands)


def _layernorm_kernel(x_ref, g_ref, b_ref, o_ref):
    """Row-wise LayerNorm (eps=1e-12, BERT); used only for the embeddings."""
    x = x_ref[...].astype(jnp.float32)
    mu = jnp.mean(x, axis=-1, keepdims=True)
    var = jnp.mean((x - mu) ** 2, axis=-1, keepdims=True)
    y = (x - mu) * jax.lax.rsqrt(var + 1e-12)
    o_ref[...] = (y * g_ref[...] + b_ref[...]).astype(o_ref.dtype)


def layernorm(x, gamma, beta, out_dtype=jnp.bfloat16):
    M, H = x.shape
    tm = _divisor_tiles(M, (512, 256, 128, 64, 32, 16, 8))[0]
    row_spec = pl.BlockSpec((tm, H), lambda i: (i, 0))
    vec_spec = pl.BlockSpec((1, H), lambda i: (0, 0))
    return pl.pallas_call(
        _layernorm_kernel,
        grid=(M // tm,),
        in_specs=[row_spec, vec_spec, vec_spec],
        out_specs=row_spec,
        out_shape=jax.ShapeDtypeStruct((M, H), out_dtype),
        compiler_params=pltpu.CompilerParams(
            dimension_semantics=("parallel",),
            vmem_limit_bytes=VMEM_LIMIT,
        ),
    )(x, gamma.reshape(1, H), beta.reshape(1, H))


def _attn_kernel(qkv_ref, m_ref, o_ref, *, heads_per_group, head_dim, scale):
    """One (batch, head-group) tile: masked softmax(QK^T/sqrt(d)) V per head.

    The qkv block is the group's [S, 3*GD] slab (columns q_g | k_g | v_g in
    head-major order); the group's context is written back as one lane-dense
    [S, GD] store (GD = heads_per_group * head_dim; 128 lanes at BERT scale).
    """
    gd = heads_per_group * head_dim
    qkv = qkv_ref[0]                      # [S, 3*GD] bf16
    mask = m_ref[0]                       # [1, S] additive mask over keys
    ctx = []
    for h in range(heads_per_group):
        lo = h * head_dim
        q = qkv[:, lo:lo + head_dim]
        k = qkv[:, gd + lo:gd + lo + head_dim]
        v = qkv[:, 2 * gd + lo:2 * gd + lo + head_dim]
        # Contract last dims directly -> no explicit K transpose through XLU.
        s = jax.lax.dot_general(
            q, k, (((1,), (1,)), ((), ())),
            preferred_element_type=jnp.float32) * scale       # [S, S] fp32
        s = s + mask
        s = s - jnp.max(s, axis=-1, keepdims=True)
        e = jnp.exp(s)
        p = e * pl.reciprocal(jnp.sum(e, axis=-1, keepdims=True), approx=True)
        ctx.append(jnp.dot(p.astype(jnp.bfloat16), v,
                           preferred_element_type=jnp.float32))  # [S, D]
    o_ref[0] = jnp.concatenate(ctx, axis=-1).astype(o_ref.dtype)
    # TODO(synk): for S >= ~1024 switch to a KV-tiled online (flash-style)
    # softmax to avoid materializing the full [S, S] score matrix per head.


def attention(qkv, mask_add, num_heads, head_dim):
    """qkv: [B, S, 3H] (head-group-major columns); mask_add: [B,1,S] -> [B,S,H]."""
    B, S, _ = qkv.shape
    H = num_heads * head_dim
    hpg = _head_group_size(num_heads, head_dim)
    groups = num_heads // hpg
    gd = hpg * head_dim
    scale = 1.0 / (head_dim ** 0.5)
    return pl.pallas_call(
        functools.partial(_attn_kernel, heads_per_group=hpg,
                          head_dim=head_dim, scale=scale),
        grid=(B, groups),
        in_specs=[
            pl.BlockSpec((1, S, 3 * gd), lambda b, g: (b, 0, g)),
            pl.BlockSpec((1, 1, S), lambda b, g: (b, 0, 0)),
        ],
        out_specs=pl.BlockSpec((1, S, gd), lambda b, g: (b, 0, g)),
        out_shape=jax.ShapeDtypeStruct((B, S, H), jnp.bfloat16),
        compiler_params=pltpu.CompilerParams(
            dimension_semantics=("parallel", "parallel"),
            vmem_limit_bytes=VMEM_LIMIT,
        ),
    )(qkv, mask_add)


def _head_kernel(x_ref, w_ref, b_ref, yoh_ref, logits_ref, probs_ref, loss_ref):
    """Classifier head: logits, softmax(probs), CrossEntropyLoss(probs, y).

    Faithful to the PyTorch module: loss = CE(softmax(logits), y), i.e. the
    cross-entropy (with its internal log_softmax) is applied to the
    *probabilities*, not the raw logits.
    """
    logits = jnp.dot(x_ref[...], w_ref[...],
                     preferred_element_type=jnp.float32) + b_ref[...]
    z = logits - jnp.max(logits, axis=-1, keepdims=True)
    e = jnp.exp(z)
    probs = e / jnp.sum(e, axis=-1, keepdims=True)
    z2 = probs - jnp.max(probs, axis=-1, keepdims=True)
    lse = jnp.log(jnp.sum(jnp.exp(z2), axis=-1, keepdims=True))
    logsm = z2 - lse
    per_ex = -jnp.sum(logsm * yoh_ref[...], axis=-1, keepdims=True)  # [B,1]
    logits_ref[...] = logits
    probs_ref[...] = probs
    loss_ref[...] = jnp.mean(per_ex, axis=0, keepdims=True)          # [1,1]


def classifier_head(pooled, w, b, y_onehot):
    B, _ = pooled.shape
    C = w.shape[1]
    return pl.pallas_call(
        _head_kernel,
        out_shape=(
            jax.ShapeDtypeStruct((B, C), jnp.float32),
            jax.ShapeDtypeStruct((B, C), jnp.float32),
            jax.ShapeDtypeStruct((1, 1), jnp.float32),
        ),
        compiler_params=pltpu.CompilerParams(vmem_limit_bytes=VMEM_LIMIT),
    )(pooled, w, b.reshape(1, C), y_onehot)


# --------------------------------------------------------------- parameters --

def init_params(key, cfg):
    H, FF, V, S, L = (cfg["hidden"], cfg["ffn"], cfg["vocab"],
                      cfg["seq"], cfg["layers"])
    Hn = cfg["heads"]
    D = H // Hn
    hpg = _head_group_size(Hn, D)
    G = Hn // hpg
    GD = hpg * D

    def nrm(k, shape, dtype=jnp.float32):
        return (jax.random.normal(k, shape, jnp.float32) * 0.02).astype(dtype)

    keys = iter(jax.random.split(key, 16 + 12 * L))
    bf = jnp.bfloat16  # encoder matmul weights live in bf16 (fp32 accumulate)
    p = {
        "word_emb": nrm(next(keys), (V, H)),
        "pos_emb":  nrm(next(keys), (S, H)),
        "type_emb": nrm(next(keys), (2, H)),
        "emb_ln_g": jnp.ones((H,), jnp.float32),
        "emb_ln_b": jnp.zeros((H,), jnp.float32),
        "pool_w":   nrm(next(keys), (H, H), bf),
        "pool_b":   jnp.zeros((H,), jnp.float32),
        "cls_w":    nrm(next(keys), (H, cfg["label_num"])),
        "cls_b":    jnp.zeros((cfg["label_num"],), jnp.float32),
        "aux1_w":   nrm(next(keys), (H, cfg["aux1_label_num"])),
        "aux1_b":   jnp.zeros((cfg["aux1_label_num"],), jnp.float32),
        "aux2_w":   nrm(next(keys), (H, cfg["aux2_label_num"])),
        "aux2_b":   jnp.zeros((cfg["aux2_label_num"],), jnp.float32),
        "layers": [],
    }
    for _ in range(L):
        # Fused QKV weight permuted to head-group-major columns:
        # [ q_g0 | k_g0 | v_g0 | q_g1 | k_g1 | v_g1 | ... ]  (same math as
        # separate Wq/Wk/Wv; lets the attention BlockSpec slice one contiguous
        # 128-lane group slab per grid step).
        wq, wk, wv = (nrm(next(keys), (H, H), bf) for _ in range(3))
        cols = []
        for g in range(G):
            sl = slice(g * GD, (g + 1) * GD)
            cols += [wq[:, sl], wk[:, sl], wv[:, sl]]
        p["layers"].append({
            "wqkv": jnp.concatenate(cols, axis=1),
            "bqkv": jnp.zeros((3 * H,), jnp.float32),
            "wo": nrm(next(keys), (H, H), bf), "bo": jnp.zeros((H,), jnp.float32),
            "ln1_g": jnp.ones((H,), jnp.float32), "ln1_b": jnp.zeros((H,), jnp.float32),
            "w1": nrm(next(keys), (H, FF), bf), "b1": jnp.zeros((FF,), jnp.float32),
            "w2": nrm(next(keys), (FF, H), bf), "b2": jnp.zeros((H,), jnp.float32),
            "ln2_g": jnp.ones((H,), jnp.float32), "ln2_b": jnp.zeros((H,), jnp.float32),
        })
    return p


# ------------------------------------------------------------------ forward --

def scibert_scaffold_forward(params, x, y, aux1_y, aux2_y, cfg):
    B, S = x.shape
    H, Hn = cfg["hidden"], cfg["heads"]
    D = H // Hn

    # mask = (x != 0).long()  ->  BERT extended additive mask [B, 1, S]
    mask = (x != 0).astype(jnp.float32)
    mask_add = ((1.0 - mask) * -10000.0)[:, None, :]

    # --- embeddings (lookup is glue; layernorm runs in a Pallas kernel) ---
    emb = (jnp.take(params["word_emb"], x, axis=0)
           + params["pos_emb"][None, :, :]
           + params["type_emb"][0][None, None, :])              # [B, S, H] fp32
    hidden = layernorm(emb.reshape(B * S, H),
                       params["emb_ln_g"], params["emb_ln_b"])  # [B*S, H] bf16

    # --- transformer encoder layers (all activations carried in bf16) ---
    for lp in params["layers"]:
        # fused QKV projection -> [B*S, 3H] (head-group-major columns)
        qkv = dense(hidden, lp["wqkv"], lp["bqkv"])
        ctx = attention(qkv.reshape(B, S, 3 * H), mask_add, Hn, D)  # [B, S, H]
        # attention output projection with residual-add + LayerNorm fused in
        hidden = dense(ctx.reshape(B * S, H), lp["wo"], lp["bo"],
                       residual=hidden,
                       ln_gamma=lp["ln1_g"], ln_beta=lp["ln1_b"])
        # FFN: up-proj + GELU, then down-proj with fused residual + LayerNorm
        ffn = dense(hidden, lp["w1"], lp["b1"], activation="gelu")
        hidden = dense(ffn, lp["w2"], lp["b2"],
                       residual=hidden,
                       ln_gamma=lp["ln2_g"], ln_beta=lp["ln2_b"])

    # --- pooler: tanh(W * hidden[:, 0, :] + b) ---
    cls_tok = hidden.reshape(B, S, H)[:, 0, :]                  # [B, H] bf16
    pooled = dense(cls_tok, params["pool_w"], params["pool_b"],
                   activation="tanh", out_dtype=jnp.float32)

    # TODO(synk): nn.Dropout is identity at inference; training-mode dropout omitted.

    # --- classification head ---
    # PyTorch overwrites logits/probs/loss per branch, so only the last
    # non-None label set determines the returned dict; compute only that one.
    branch = None
    for w, b, labels in (
        (params["cls_w"],  params["cls_b"],  y),
        (params["aux1_w"], params["aux1_b"], aux1_y),
        (params["aux2_w"], params["aux2_b"], aux2_y),
    ):
        if labels is not None:
            branch = (w, b, labels)
    if branch is None:
        raise ValueError("at least one of y / aux1_y / aux2_y must be given")
    w, b, labels = branch
    C = w.shape[1]
    yoh = jax.nn.one_hot(labels, C, dtype=jnp.float32)
    logits, probs, loss = classifier_head(pooled, w, b, yoh)
    return {"logits": logits, "probs": probs, "loss": loss[0, 0]}


# --------------------------------------------------------------------- main --

if __name__ == "__main__":
    cfg = dict(
        vocab=50, seq=8, hidden=32, heads=4, ffn=64, layers=2,
        label_num=3, aux1_label_num=4, aux2_label_num=5,
    )
    B, S = 2, cfg["seq"]

    key = jax.random.PRNGKey(0)
    kp, kx, ky, k1, k2 = jax.random.split(key, 5)

    params = init_params(kp, cfg)

    x = jax.random.randint(kx, (B, S), 1, cfg["vocab"]).astype(jnp.int32)
    x = x.at[:, 0].set(2)          # CLS-like token
    x = x.at[:, -2:].set(0)        # trailing padding -> exercises the mask
    y = jax.random.randint(ky, (B,), 0, cfg["label_num"]).astype(jnp.int32)
    aux1_y = jax.random.randint(k1, (B,), 0, cfg["aux1_label_num"]).astype(jnp.int32)
    aux2_y = jax.random.randint(k2, (B,), 0, cfg["aux2_label_num"]).astype(jnp.int32)

    out = scibert_scaffold_forward(params, x, y, aux1_y, aux2_y, cfg)
    jax.block_until_ready(out)

    assert out["logits"].shape == (B, cfg["aux2_label_num"])
    assert out["probs"].shape == (B, cfg["aux2_label_num"])
    assert out["loss"].shape == ()
    print("KERNEL_OK")
</pallas_src>

<mosaic_0001>
module attributes {stable_mosaic.version = 11 : i64} {
  func.func @_layernorm_kernel(%arg0: i32, %arg1: memref<16x32xf32, #tpu.memory_space<vmem>>, %arg2: memref<1x32xf32, #tpu.memory_space<vmem>>, %arg3: memref<1x32xf32, #tpu.memory_space<vmem>>, %arg4: memref<16x32xbf16, #tpu.memory_space<vmem>>) attributes {dimension_semantics = [#tpu.dimension_semantics<parallel>], iteration_bounds = array<i64: 1>, scalar_prefetch = 0 : i64, scratch_operands = 0 : i64, tpu.core_type = #tpu.core_type<tc>, window_params = [{transform_indices = @transform_0, window_bounds = array<i64: 16, 32>}, {pipeline_mode = #tpu.pipeline_mode<synchronous>, transform_indices = @transform_1, window_bounds = array<i64: 1, 32>}, {pipeline_mode = #tpu.pipeline_mode<synchronous>, transform_indices = @transform_2, window_bounds = array<i64: 1, 32>}, {transform_indices = @transform_3, window_bounds = array<i64: 16, 32>}]} {
    %c0 = arith.constant 0 : index
    %c0_0 = arith.constant 0 : index
    %0 = vector.load %arg1[%c0, %c0_0] : memref<16x32xf32, #tpu.memory_space<vmem>>, vector<16x32xf32>
    %cst = arith.constant dense<0.000000e+00> : vector<16xf32>
    %1 = vector.multi_reduction <add>, %0, %cst [1] : vector<16x32xf32> to vector<16xf32>
    %2 = vector.shape_cast %1 : vector<16xf32> to vector<16x1xf32>
    %cst_1 = arith.constant 3.200000e+01 : f32
    %3 = vector.broadcast %cst_1 : f32 to vector<16x1xf32>
    %4 = arith.divf %2, %3 : vector<16x1xf32>
    %5 = vector.broadcast %4 : vector<16x1xf32> to vector<16x32xf32>
    %6 = arith.subf %0, %5 : vector<16x32xf32>
    %7 = arith.mulf %6, %6 : vector<16x32xf32>
    %cst_2 = arith.constant dense<0.000000e+00> : vector<16xf32>
    %8 = vector.multi_reduction <add>, %7, %cst_2 [1] : vector<16x32xf32> to vector<16xf32>
    %9 = vector.shape_cast %8 : vector<16xf32> to vector<16x1xf32>
    %cst_3 = arith.constant 3.200000e+01 : f32
    %10 = vector.broadcast %cst_3 : f32 to vector<16x1xf32>
    %11 = arith.divf %9, %10 : vector<16x1xf32>
    %12 = vector.broadcast %4 : vector<16x1xf32> to vector<16x32xf32>
    %13 = arith.subf %0, %12 : vector<16x32xf32>
    %cst_4 = arith.constant 9.99999996E-13 : f32
    %14 = vector.broadcast %cst_4 : f32 to vector<16x1xf32>
    %15 = arith.addf %11, %14 : vector<16x1xf32>
    %16 = math.rsqrt %15 : vector<16x1xf32>
    %17 = vector.broadcast %16 : vector<16x1xf32> to vector<16x32xf32>
    %18 = arith.mulf %13, %17 : vector<16x32xf32>
    %c0_5 = arith.constant 0 : index
    %c0_6 = arith.constant 0 : index
    %19 = vector.load %arg2[%c0_5, %c0_6] : memref<1x32xf32, #tpu.memory_space<vmem>>, vector<1x32xf32>
    %20 = vector.broadcast %19 : vector<1x32xf32> to vector<16x32xf32>
    %21 = arith.mulf %18, %20 : vector<16x32xf32>
    %c0_7 = arith.constant 0 : index
    %c0_8 = arith.constant 0 : index
    %22 = vector.load %arg3[%c0_7, %c0_8] : memref<1x32xf32, #tpu.memory_space<vmem>>, vector<1x32xf32>
    %23 = vector.broadcast %22 : vector<1x32xf32> to vector<16x32xf32>
    %24 = arith.addf %21, %23 : vector<16x32xf32>
    %25 = arith.truncf %24 : vector<16x32xf32> to vector<16x32xbf16>
    %c0_9 = arith.constant 0 : index
    %c0_10 = arith.constant 0 : index
    %26 = vector.load %arg4[%c0_9, %c0_10] : memref<16x32xbf16, #tpu.memory_space<vmem>>, vector<16x32xbf16>
    tpu.vector_store %arg4[%c0_9, %c0_10], %25 {strides = array<i32>} : memref<16x32xbf16, #tpu.memory_space<vmem>>, vector<16x32xbf16>,
    return
  }
  func.func @transform_0(%arg0: i32) -> (i32, i32) {
    %c0_i32 = arith.constant 0 : i32
    %c0_i32_0 = arith.constant 0 : i32
    return %arg0, %c0_i32 : i32, i32
  }
  func.func @transform_1(%arg0: i32) -> (i32, i32) {
    %c0_i32 = arith.constant 0 : i32
    %c0_i32_0 = arith.constant 0 : i32
    %c0_i32_1 = arith.constant 0 : i32
    return %c0_i32, %c0_i32_0 : i32, i32
  }
  func.func @transform_2(%arg0: i32) -> (i32, i32) {
    %c0_i32 = arith.constant 0 : i32
    %c0_i32_0 = arith.constant 0 : i32
    %c0_i32_1 = arith.constant 0 : i32
    return %c0_i32, %c0_i32_0 : i32, i32
  }
  func.func @transform_3(%arg0: i32) -> (i32, i32) {
    %c0_i32 = arith.constant 0 : i32
    %c0_i32_0 = arith.constant 0 : i32
    return %arg0, %c0_i32 : i32, i32
  }
}

</mosaic_0001>

<llo_original>
// kernel: tpu_custom_call.1
$region0: #{tpu_custom_call.1}
  #allocation0 [shape = 'u32[]', space=smem, size = 0x4, offset = 0x4, fixed_abs, tag = 'smem constant byte address 0x4 - core index']
  #allocation1 [shape = 'u32[144,128]{1,0:T(1,128)}', space=vmem, size = 0x12000, scoped, tag = 'internal scratch']
  %s0 = inlined_call_operand.hbm [shape: f32[16,32], index: 0, kind: input, shape index: {}]
  %s1 = inlined_call_operand.vmem [shape: f32[1,32], index: 1, kind: input, shape index: {}]
  %s2 = inlined_call_operand.vmem [shape: f32[1,32], index: 2, kind: input, shape index: {}]
  %s3 = inlined_call_operand.hbm [shape: bf16[16,32], index: 3, kind: output, shape index: {}]
  %s4 = sld [smem:[#allocation0]]
  $region26: #{tpu_custom_call.1} parent=0
    _
  %s6 = ssub.s32 1, %s4
  %s7 = scalar_select 0, %s6, %s4
  $region1: #{tpu_custom_call.1} parent=0
    #allocation2 [shape = 'u8[8192]{0}', space=vmem, size = 0x2000, scoped, tag = 'input window, operand 0, single buffered']
    #allocation3 [shape = 's32[1]{0}', space=sflag, size = 0x4, scoped, tag = 'scoped memory for tpu_custom_call.1']
    #allocation4 [shape = 's32[1]{0}', space=sflag, size = 0x4, scoped, tag = 'scoped memory for tpu_custom_call.1']
    #allocation5 [shape = 'u8[4096]{0}', space=vmem, size = 0x1000, scoped, tag = 'output window, operand 0, single buffered']
    %8 = vsyncpa [#allocation3], 0
    %9 = vsyncpa [#allocation4], 0
    // Predicated region
    $region2: #{tpu_custom_call.1} parent=1 // pred_check
      _
    $region3: #{tpu_custom_call.1} parent=1 // pred_check_branch
      %11 = sbr.rel (0) target = $region5
    $region4: #{tpu_custom_call.1} parent=1 // pred_region
      %s13 = ssub.s32 256, 256
      %14 = vsyncadd [#allocation3], %s13
      %s15 = sshll.u32 [#allocation2], 4
      %s16 = int_to_ptr.vmem [resolvable:$true] %s15
      %21 = dma.hbm_to_vmem [thread:$0]  %s0, 256, %s16, [#allocation3], 128, 128, 8
    $region5: #{tpu_custom_call.1} parent=1 // pred_fallthru
      _
    // Predicated region
    $region6: #{tpu_custom_call.1} parent=1 // pred_check
      _
    $region7: #{tpu_custom_call.1} parent=1 // pred_check_branch
      %23 = sbr.rel (0) target = $region9
    $region8: #{tpu_custom_call.1} parent=1 // pred_region
      _
    $region9: #{tpu_custom_call.1} parent=1 // pred_fallthru
      _
    // Predicated region
    $region10: #{tpu_custom_call.1} parent=1 // pred_check
      _
    $region11: #{tpu_custom_call.1} parent=1 // pred_check_branch
      %25 = sbr.rel (0) target = $region13
    $region12: #{tpu_custom_call.1} parent=1 // pred_region
      _
    $region13: #{tpu_custom_call.1} parent=1 // pred_fallthru
      _
    // Predicated region
    $region14: #{tpu_custom_call.1} parent=1 // pred_check
      _
    $region15: #{tpu_custom_call.1} parent=1 // pred_check_branch
      %27 = sbr.rel (0) target = $region17
    $region16: #{tpu_custom_call.1} parent=1 // pred_region
      %28 = dma.done [#allocation3], 256
    $region17: #{tpu_custom_call.1} parent=1 // pred_fallthru
      _
    %v29 = vld [vmem:[#allocation2] sm:$0xff]
    %v30 = vld [vmem:[#allocation2 + $0x8] sm:$0xff]
    %vm31 = vcmask 261120
    %v32 = vsel %vm31, %v29, 0.0
    %33 = vadd.xlane.f32.xlu0 %v32
    %v34 = vpop.xlane.xlu0 %33
    %v35 = vsel %vm31, %v30, 0.0
    %36 = vadd.xlane.f32.xlu0 %v35
    %v37 = vpop.xlane.xlu0 %36
    %v38 = vrcp.pop 32.0
    %v39 = vmul.f32 %v34, %v38
    %v40 = vmul.f32 %v37, %v38
    %v41 = vsub.f32 %v29, %v39
    %v42 = vsub.f32 %v30, %v40
    %v43 = vmul.f32 %v41, %v41
    %v44 = vmul.f32 %v42, %v42
    %v45 = vsel %vm31, %v43, 0.0
    %46 = vadd.xlane.f32.xlu0 %v45
    %v47 = vpop.xlane.xlu0 %46
    %v48 = vsel %vm31, %v44, 0.0
    %49 = vadd.xlane.f32.xlu0 %v48
    %v50 = vpop.xlane.xlu0 %49
    %v51 = vmul.f32 %v47, %v38
    %v52 = vmul.f32 %v50, %v38
    %v53 = vadd.f32 %v51, 1e-12
    %v54 = vadd.f32 %v52, 1e-12
    %v55 = vrsqrt.pop %v53
    %v56 = vrsqrt.pop %v54
    %v57 = vmul.f32 %v41, %v55
    %v58 = vmul.f32 %v42, %v56
    %v59 = vld [vmem:[%s1] sm:$0x1]
    %v61 = vlaneseq
    %v62 = vshrl.u32 %v61, 7
    %v63 = vsub.s32 0, %v62
    %v64 = vrot.slane %v59, %v63
    %v66 = vmul.f32 %v57, %v64
    %v67 = vmul.f32 %v58, %v64
    %v68 = vld [vmem:[%s2] sm:$0x1]
    %v70 = vlaneseq
    %v71 = vshrl.u32 %v70, 7
    %v72 = vsub.s32 0, %v71
    %v73 = vrot.slane %v68, %v72
    %v75 = vadd.f32 %v66, %v73
    %v76 = vadd.f32 %v67, %v73
    %v77 = vpack.c.bf16 %v76, %v75
    %v79 = vunpack.c.l.b16 %v77
    %v80 = vunpack.c.h.b16 %v77
    %v81 = vpack.c.b16 %v79, %v79
    %v82 = vpack.c.b16 %v80, %v80
    %vm85 = vcmask 257024
    %86 = vst.msk [vmem:[#allocation5] sm:$0xf] %vm85, %v81
    %87 = vst.msk [vmem:[#allocation5 + $0x4] sm:$0xf] %vm85, %v82
    // Predicated region
    $region18: #{tpu_custom_call.1} parent=1 // pred_check
      _
    $region19: #{tpu_custom_call.1} parent=1 // pred_check_branch
      %89 = sbr.rel (0) target = $region21
    $region20: #{tpu_custom_call.1} parent=1 // pred_region
      %s91 = ssub.s32 128, 128
      %92 = vsyncadd [#allocation4], %s91
      %s93 = sshll.u32 [#allocation5], 4
      %s94 = int_to_ptr.vmem [resolvable:$true] %s93
      %99 = dma.vmem_to_hbm [thread:$0]  %s94, 128, %s3, [#allocation4], 64, 64, 4
    $region21: #{tpu_custom_call.1} parent=1 // pred_fallthru
      _
    // Predicated region
    $region22: #{tpu_custom_call.1} parent=1 // pred_check
      _
    $region23: #{tpu_custom_call.1} parent=1 // pred_check_branch
      %101 = sbr.rel (0) target = $region25
    $region24: #{tpu_custom_call.1} parent=1 // pred_region
      %102 = dma.done [#allocation4], 128
    $region25: #{tpu_custom_call.1} parent=1 // pred_fallthru
      _
    %103 = vsyncpa [#allocation3], 1
    %104 = vsyncpa [#allocation4], 1

</llo_original>
